<compile_context>
chip_gen: v7x
topology: tpu7x:2x2x1
jax: 0.10.0
libtpu: 0.0.40
codegen_flags: <defaults>
</compile_context>

<pallas_src>
import functools

import jax
import jax.numpy as jnp
from jax import lax
from jax.experimental import pallas as pl
from jax.experimental.pallas import tpu as pltpu

_MXU_DTYPE = jnp.bfloat16


def _sepconv_kernel(B, C, Cout, H, W, K, shortcut,
                    x_ref, dwf_ref, bn1b_ref, mask_ref,
                    w1_ref, b1_ref, w2_ref, b2_ref,
                    pwt_ref, bn2b_ref, out_ref):
    """Fused SepConv forward for one batch tile (B images).

    depthwise KxK conv (BN1 scale pre-folded) -> +BN1 shift -> Swish
      -> SE (global avg pool + Linear/Swish/Linear/Sigmoid, batched over the tile)
      -> 1x1 projection with the SE gate and BN2 scale folded into the weights
      -> +BN2 shift -> optional residual add.
    """
    HW = H * W
    pad = K // 2

    x = x_ref[...]                      # (B, C, HW) f32 (also used as the residual)
    dwf = dwf_ref[...]                  # (C, K*K) f32 : depthwise weights * BN1 scale
    msk = mask_ref[...]                 # (K*K, HW) f32 : 0/1 'same'-padding validity masks

    # ---- depthwise KxK conv, stride 1: each tap = lane rotation (XLU) + mask + weight ----
    acc = jnp.zeros((B, C, HW), jnp.float32)
    for kh in range(K):
        for kw in range(K):
            tap = kh * K + kw
            off = (kh - pad) * W + (kw - pad)          # flat source offset of this tap
            wvec = dwf[:, tap:tap + 1]                 # (C, 1) broadcast over (B, ., HW)
            if off == 0:
                acc = acc + x * wvec                   # center tap: mask is all ones
            else:
                shifted = pltpu.roll(x, shift=(-off) % HW, axis=2)
                acc = acc + (shifted * msk[tap:tap + 1, :]) * wvec

    r = acc + bn1b_ref[...]             # BN1 shift (scale already folded into dwf)
    r = r * jax.nn.sigmoid(r)           # Swish (f32, EUP)

    # ---- SE block, batched over the tile: avg pool -> Linear -> Swish -> Linear -> Sigmoid
    s = (jnp.sum(r, axis=2) * (1.0 / HW)).astype(_MXU_DTYPE)                    # (B, C)
    h1 = jnp.dot(s, w1_ref[...], preferred_element_type=jnp.float32) + b1_ref[...]
    h1 = h1 * jax.nn.sigmoid(h1)
    h2 = jnp.dot(h1.astype(_MXU_DTYPE), w2_ref[...],
                 preferred_element_type=jnp.float32) + b2_ref[...]
    se = jax.nn.sigmoid(h2)                                                     # (B, C) f32

    # ---- 1x1 projection: SE gate + BN2 scale folded into the (Cout, C) weights ----
    for b in range(B):                  # static unroll over the batch tile
        pwb = (pwt_ref[...] * se[b:b + 1, :]).astype(_MXU_DTYPE)                # (Cout, C)
        proj = jnp.dot(pwb, r[b].astype(_MXU_DTYPE),
                       preferred_element_type=jnp.float32)                      # (Cout, HW)
        proj = proj + bn2b_ref[...]     # BN2 shift
        if shortcut:
            proj = proj + x[b]          # residual add in f32
        out_ref[b] = proj.astype(out_ref.dtype)


def sep_conv_forward(x_nchw, params, kernel_size, stride=1, block_batch=8):
    """SepConv forward. x_nchw: (N, C, H, W) float32. Returns (N, Cout, H, W) float32."""
    # TODO(synk): training-mode stochastic depth (torch.bernoulli(self.p) skip) is a
    # host-side control-flow decision; this kernel implements inference semantics.
    if stride != 1:
        raise NotImplementedError(
            "Pallas SepConv kernel implements the stride=1 forward only.")
    N, C, H, W = x_nchw.shape
    K = int(kernel_size)
    pad = K // 2
    HW = H * W
    Cout = params["pw"].shape[1]
    Cr = params["w1"].shape[1]
    shortcut = (stride == 1) and (C == Cout)

    # Largest batch tile that divides N (amortizes per-grid-step overhead, batches SE work).
    bt = min(block_batch, N)
    while N % bt:
        bt -= 1

    # Channel-major, spatially-flattened layout: pure reshape (no transpose / extra HBM pass).
    x = x_nchw.reshape(N, C, HW).astype(jnp.float32)

    # Fold BN scales into the adjacent weights; keep per-channel shifts as biases.
    dwf = (params["dw"] * params["bn1_scale"][None, :]).T.astype(jnp.float32)     # (C, K*K)
    bn1b = params["bn1_shift"].reshape(C, 1).astype(jnp.float32)
    pwt = (params["pw"] * params["bn2_scale"][None, :]).T.astype(_MXU_DTYPE)      # (Cout, C)
    bn2b = params["bn2_shift"].reshape(Cout, 1).astype(jnp.float32)
    w1b = params["w1"].astype(_MXU_DTYPE)                                         # (C, Cr)
    b1 = params["b1"].reshape(1, Cr).astype(jnp.float32)
    w2b = params["w2"].astype(_MXU_DTYPE)                                         # (Cr, C)
    b2 = params["b2"].reshape(1, C).astype(jnp.float32)

    # Per-tap 0/1 validity masks implementing 'same' zero padding on the flat H*W layout.
    hh = jnp.arange(H)[:, None]
    ww = jnp.arange(W)[None, :]
    masks = []
    for kh in range(K):
        for kw in range(K):
            dh, dw_ = kh - pad, kw - pad
            valid = (hh + dh >= 0) & (hh + dh < H) & (ww + dw_ >= 0) & (ww + dw_ < W)
            masks.append(valid.reshape(HW))
    mask = jnp.stack(masks, axis=0).astype(jnp.float32)                           # (K*K, HW)

    kern = functools.partial(_sepconv_kernel, bt, C, Cout, H, W, K, shortcut)

    def _full(shape):
        return pl.BlockSpec(shape, lambda n: (0, 0))

    cost = pl.CostEstimate(
        flops=int(N * HW * C * (3 * K * K + 4)             # depthwise taps + BN + swish
                  + 4 * N * C * Cr                         # SE linears
                  + 2 * N * Cout * C * HW                  # 1x1 projection
                  + 2 * N * Cout * HW),                    # bias + residual
        transcendentals=int(N * HW * C + N * (Cr + 2 * C)),
        bytes_accessed=int(4 * x.size + 4 * N * Cout * HW
                           + 4 * (dwf.size + bn1b.size + mask.size
                                  + b1.size + b2.size + bn2b.size)
                           + 2 * (w1b.size + w2b.size + pwt.size)),
    )

    out = pl.pallas_call(
        kern,
        out_shape=jax.ShapeDtypeStruct((N, Cout, HW), jnp.float32),
        grid_spec=pltpu.PrefetchScalarGridSpec(
            num_scalar_prefetch=0,
            grid=(N // bt,),
            in_specs=[
                pl.BlockSpec((bt, C, HW), lambda n: (n, 0, 0)),   # input (lane-dense)
                _full((C, K * K)),                                # depthwise * BN1 scale
                _full((C, 1)),                                    # BN1 shift
                _full((K * K, HW)),                               # tap validity masks
                _full((C, Cr)), _full((1, Cr)),                   # SE linear 1 (bf16) + bias
                _full((Cr, C)), _full((1, C)),                    # SE linear 2 (bf16) + bias
                _full((Cout, C)),                                 # 1x1 proj * BN2 scale (bf16)
                _full((Cout, 1)),                                 # BN2 shift
            ],
            out_specs=pl.BlockSpec((bt, Cout, HW), lambda n: (n, 0, 0)),
        ),
        compiler_params=pltpu.CompilerParams(
            dimension_semantics=("parallel",),
            vmem_limit_bytes=48 * 1024 * 1024,
        ),
        cost_estimate=cost,
    )(x, dwf, bn1b, mask, w1b, b1, w2b, b2, pwt, bn2b)

    # TODO(synk): for EfficientNet-scale H*W (e.g. 112*112) on v7x (64 MiB VMEM/TC), add a
    # row-blocked grid axis with a K//2 halo and a two-pass (pre-SE / post-SE) structure.
    return out.reshape(N, Cout, H, W)


def init_params(key, C, Cout, K, se_scale):
    """Deterministic synthetic parameters with the same shapes as the PyTorch module
    (inference mode: BatchNorm running stats folded into per-channel scale/shift)."""
    Cr = C * se_scale
    eps = 1e-3
    ks = jax.random.split(key, 12)
    dw = 0.3 * jax.random.normal(ks[0], (K * K, C), jnp.float32)   # depthwise conv weight

    bn1_gamma = 1.0 + 0.1 * jax.random.normal(ks[1], (C,), jnp.float32)
    bn1_beta = 0.1 * jax.random.normal(ks[2], (C,), jnp.float32)
    bn1_mean = 0.05 * jax.random.normal(ks[3], (C,), jnp.float32)
    bn1_var = jnp.abs(1.0 + 0.1 * jax.random.normal(ks[4], (C,), jnp.float32))
    bn1_scale = bn1_gamma / jnp.sqrt(bn1_var + eps)
    bn1_shift = bn1_beta - bn1_mean * bn1_scale

    w1 = jax.random.normal(ks[5], (C, Cr), jnp.float32) / jnp.sqrt(float(C))
    b1 = 0.1 * jax.random.normal(ks[6], (Cr,), jnp.float32)
    w2 = jax.random.normal(ks[7], (Cr, C), jnp.float32) / jnp.sqrt(float(Cr))
    b2 = 0.1 * jax.random.normal(ks[8], (C,), jnp.float32)

    pw = jax.random.normal(ks[9], (C, Cout), jnp.float32) / jnp.sqrt(float(C))
    bn2_gamma = 1.0 + 0.1 * jax.random.normal(ks[10], (Cout,), jnp.float32)
    bn2_beta = 0.1 * jax.random.normal(ks[11], (Cout,), jnp.float32)
    bn2_mean = jnp.zeros((Cout,), jnp.float32)        # fresh-init running stats
    bn2_var = jnp.ones((Cout,), jnp.float32)
    bn2_scale = bn2_gamma / jnp.sqrt(bn2_var + eps)
    bn2_shift = bn2_beta - bn2_mean * bn2_scale

    return dict(dw=dw, bn1_scale=bn1_scale, bn1_shift=bn1_shift,
                w1=w1, b1=b1, w2=w2, b2=b2,
                pw=pw, bn2_scale=bn2_scale, bn2_shift=bn2_shift)


def sep_conv_reference(x_nchw, params, K, stride=1, mxu_dtype=jnp.float32):
    """Pure-JAX (XLA) reference mirroring the PyTorch forward.

    With mxu_dtype=float32 this is the exact module math; with mxu_dtype=bfloat16 it applies
    the same bf16-at-MXU-boundary casts as the Pallas kernel (f32 accumulation & elementwise
    math), so the kernel can be checked at a tight tolerance."""
    N, C, H, W = x_nchw.shape
    pad = K // 2
    Cout = params["pw"].shape[1]
    prec = lax.Precision.HIGHEST if mxu_dtype == jnp.float32 else lax.Precision.DEFAULT

    # depthwise conv (exact f32)
    dw_oihw = jnp.transpose(params["dw"].reshape(K, K, C), (2, 0, 1))[:, None, :, :]
    y = lax.conv_general_dilated(
        x_nchw, dw_oihw, (1, 1), [(pad, pad), (pad, pad)],
        feature_group_count=C, dimension_numbers=("NCHW", "OIHW", "NCHW"),
        precision=lax.Precision.HIGHEST)
    y = y * params["bn1_scale"].reshape(1, C, 1, 1) + params["bn1_shift"].reshape(1, C, 1, 1)
    y = y * jax.nn.sigmoid(y)

    # SE block
    s = jnp.mean(y, axis=(2, 3))                                                  # (N, C)
    h1 = jnp.dot(s.astype(mxu_dtype), params["w1"].astype(mxu_dtype),
                 preferred_element_type=jnp.float32, precision=prec) + params["b1"][None, :]
    h1 = h1 * jax.nn.sigmoid(h1)
    h2 = jnp.dot(h1.astype(mxu_dtype), params["w2"].astype(mxu_dtype),
                 preferred_element_type=jnp.float32, precision=prec) + params["b2"][None, :]
    se = jax.nn.sigmoid(h2)                                                       # (N, C)

    # 1x1 projection; SE gate + BN2 scale folded into the weights ( == pw @ (se * y) )
    pwt = (params["pw"] * params["bn2_scale"][None, :]).T.astype(mxu_dtype)       # (Cout, C)
    pw_eff = (pwt.astype(jnp.float32) * se[:, None, :]).astype(mxu_dtype)         # (N,Cout,C)
    z = jnp.einsum("noc,nchw->nohw", pw_eff, y.astype(mxu_dtype),
                   preferred_element_type=jnp.float32, precision=prec)
    z = z + params["bn2_shift"].reshape(1, Cout, 1, 1)
    if stride == 1 and C == Cout:
        z = z + x_nchw
    return z


if __name__ == "__main__":
    key = jax.random.PRNGKey(0)
    kx, kp = jax.random.split(key)

    N, C, H, W = 2, 4, 16, 16
    K = 3
    se_scale = 4
    Cout = C                      # in_channels == out_channels, stride=1 -> shortcut active

    x = jax.random.normal(kx, (N, C, H, W), jnp.float32)
    params = init_params(kp, C, Cout, K, se_scale)

    out = jax.block_until_ready(sep_conv_forward(x, params, K, stride=1))
    assert out.shape == (N, Cout, H, W), out.shape

    # (1) Tight check against a reference using the kernel's numerics contract
    #     (bf16 MXU inputs, f32 accumulation & elementwise math).
    ref_matched = sep_conv_reference(x, params, K, stride=1, mxu_dtype=_MXU_DTYPE)
    if not bool(jnp.allclose(out, ref_matched, atol=1e-2, rtol=1e-2)):
        err = float(jnp.max(jnp.abs(out - ref_matched)))
        raise AssertionError(
            f"Pallas SepConv mismatch vs matched-precision reference (max abs err {err})")

    # (2) Aggregate check against the exact-f32 module math (slack covers bf16 MXU rounding).
    ref_f32 = sep_conv_reference(x, params, K, stride=1, mxu_dtype=jnp.float32)
    rel = float(jnp.linalg.norm(out - ref_f32) / jnp.linalg.norm(ref_f32))
    if not rel < 3e-2:
        raise AssertionError(f"Pallas SepConv deviates from f32 module math (rel err {rel})")

    print("KERNEL_OK")
</pallas_src>

<mosaic_0001>
module attributes {stable_mosaic.version = 11 : i64} {
  func.func @_sepconv_kernel(%arg0: i32, %arg1: memref<2x4x256xf32, #tpu.memory_space<vmem>>, %arg2: memref<4x9xf32, #tpu.memory_space<vmem>>, %arg3: memref<4x1xf32, #tpu.memory_space<vmem>>, %arg4: memref<9x256xf32, #tpu.memory_space<vmem>>, %arg5: memref<4x16xbf16, #tpu.memory_space<vmem>>, %arg6: memref<1x16xf32, #tpu.memory_space<vmem>>, %arg7: memref<16x4xbf16, #tpu.memory_space<vmem>>, %arg8: memref<1x4xf32, #tpu.memory_space<vmem>>, %arg9: memref<4x4xbf16, #tpu.memory_space<vmem>>, %arg10: memref<4x1xf32, #tpu.memory_space<vmem>>, %arg11: memref<2x4x256xf32, #tpu.memory_space<vmem>>) attributes {dimension_semantics = [#tpu.dimension_semantics<parallel>], iteration_bounds = array<i64: 1>, scalar_prefetch = 0 : i64, scratch_operands = 0 : i64, tpu.core_type = #tpu.core_type<tc>, window_params = [{transform_indices = @transform_0, window_bounds = array<i64: 2, 4, 256>}, {pipeline_mode = #tpu.pipeline_mode<synchronous>, transform_indices = @transform_1, window_bounds = array<i64: 4, 9>}, {pipeline_mode = #tpu.pipeline_mode<synchronous>, transform_indices = @transform_2, window_bounds = array<i64: 4, 1>}, {pipeline_mode = #tpu.pipeline_mode<synchronous>, transform_indices = @transform_3, window_bounds = array<i64: 9, 256>}, {pipeline_mode = #tpu.pipeline_mode<synchronous>, transform_indices = @transform_4, window_bounds = array<i64: 4, 16>}, {pipeline_mode = #tpu.pipeline_mode<synchronous>, transform_indices = @transform_5, window_bounds = array<i64: 1, 16>}, {pipeline_mode = #tpu.pipeline_mode<synchronous>, transform_indices = @transform_6, window_bounds = array<i64: 16, 4>}, {pipeline_mode = #tpu.pipeline_mode<synchronous>, transform_indices = @transform_7, window_bounds = array<i64: 1, 4>}, {pipeline_mode = #tpu.pipeline_mode<synchronous>, transform_indices = @transform_8, window_bounds = array<i64: 4, 4>}, {pipeline_mode = #tpu.pipeline_mode<synchronous>, transform_indices = @transform_9, window_bounds = array<i64: 4, 1>}, {transform_indices = @transform_10, window_bounds = array<i64: 2, 4, 256>}]} {
    %c0 = arith.constant 0 : index
    %c0_0 = arith.constant 0 : index
    %c0_1 = arith.constant 0 : index
    %0 = vector.load %arg1[%c0, %c0_0, %c0_1] : memref<2x4x256xf32, #tpu.memory_space<vmem>>, vector<2x4x256xf32>
    %c0_2 = arith.constant 0 : index
    %c0_3 = arith.constant 0 : index
    %1 = vector.load %arg2[%c0_2, %c0_3] : memref<4x9xf32, #tpu.memory_space<vmem>>, vector<4x9xf32>
    %c0_4 = arith.constant 0 : index
    %c0_5 = arith.constant 0 : index
    %2 = vector.load %arg4[%c0_4, %c0_5] : memref<9x256xf32, #tpu.memory_space<vmem>>, vector<9x256xf32>
    %cst = arith.constant 0.000000e+00 : f32
    %3 = vector.broadcast %cst : f32 to vector<2x4x256xf32>
    %4 = vector.extract_strided_slice %1 {offsets = [0, 0], sizes = [4, 1], strides = [1, 1]} : vector<4x9xf32> to vector<4x1xf32>
    %c17_i32 = arith.constant 17 : i32
    %5 = tpu.dynamic_rotate %0 by %c17_i32 dim 2 : vector<2x4x256xf32>, i32 -> vector<2x4x256xf32>
    %6 = vector.extract_strided_slice %2 {offsets = [0, 0], sizes = [1, 256], strides = [1, 1]} : vector<9x256xf32> to vector<1x256xf32>
    %7 = vector.shape_cast %6 : vector<1x256xf32> to vector<1x1x256xf32>
    %8 = vector.broadcast %7 : vector<1x1x256xf32> to vector<2x4x256xf32>
    %9 = arith.mulf %5, %8 : vector<2x4x256xf32>
    %10 = vector.shape_cast %4 : vector<4x1xf32> to vector<1x4x1xf32>
    %11 = vector.broadcast %10 : vector<1x4x1xf32> to vector<2x4x256xf32>
    %12 = arith.mulf %9, %11 : vector<2x4x256xf32>
    %13 = arith.addf %3, %12 : vector<2x4x256xf32>
    %14 = vector.extract_strided_slice %1 {offsets = [0, 1], sizes = [4, 1], strides = [1, 1]} : vector<4x9xf32> to vector<4x1xf32>
    %c16_i32 = arith.constant 16 : i32
    %15 = tpu.dynamic_rotate %0 by %c16_i32 dim 2 : vector<2x4x256xf32>, i32 -> vector<2x4x256xf32>
    %16 = vector.extract_strided_slice %2 {offsets = [1, 0], sizes = [1, 256], strides = [1, 1]} : vector<9x256xf32> to vector<1x256xf32>
    %17 = vector.shape_cast %16 : vector<1x256xf32> to vector<1x1x256xf32>
    %18 = vector.broadcast %17 : vector<1x1x256xf32> to vector<2x4x256xf32>
    %19 = arith.mulf %15, %18 : vector<2x4x256xf32>
    %20 = vector.shape_cast %14 : vector<4x1xf32> to vector<1x4x1xf32>
    %21 = vector.broadcast %20 : vector<1x4x1xf32> to vector<2x4x256xf32>
    %22 = arith.mulf %19, %21 : vector<2x4x256xf32>
    %23 = arith.addf %13, %22 : vector<2x4x256xf32>
    %24 = vector.extract_strided_slice %1 {offsets = [0, 2], sizes = [4, 1], strides = [1, 1]} : vector<4x9xf32> to vector<4x1xf32>
    %c15_i32 = arith.constant 15 : i32
    %25 = tpu.dynamic_rotate %0 by %c15_i32 dim 2 : vector<2x4x256xf32>, i32 -> vector<2x4x256xf32>
    %26 = vector.extract_strided_slice %2 {offsets = [2, 0], sizes = [1, 256], strides = [1, 1]} : vector<9x256xf32> to vector<1x256xf32>
    %27 = vector.shape_cast %26 : vector<1x256xf32> to vector<1x1x256xf32>
    %28 = vector.broadcast %27 : vector<1x1x256xf32> to vector<2x4x256xf32>
    %29 = arith.mulf %25, %28 : vector<2x4x256xf32>
    %30 = vector.shape_cast %24 : vector<4x1xf32> to vector<1x4x1xf32>
    %31 = vector.broadcast %30 : vector<1x4x1xf32> to vector<2x4x256xf32>
    %32 = arith.mulf %29, %31 : vector<2x4x256xf32>
    %33 = arith.addf %23, %32 : vector<2x4x256xf32>
    %34 = vector.extract_strided_slice %1 {offsets = [0, 3], sizes = [4, 1], strides = [1, 1]} : vector<4x9xf32> to vector<4x1xf32>
    %c1_i32 = arith.constant 1 : i32
    %35 = tpu.dynamic_rotate %0 by %c1_i32 dim 2 : vector<2x4x256xf32>, i32 -> vector<2x4x256xf32>
    %36 = vector.extract_strided_slice %2 {offsets = [3, 0], sizes = [1, 256], strides = [1, 1]} : vector<9x256xf32> to vector<1x256xf32>
    %37 = vector.shape_cast %36 : vector<1x256xf32> to vector<1x1x256xf32>
    %38 = vector.broadcast %37 : vector<1x1x256xf32> to vector<2x4x256xf32>
    %39 = arith.mulf %35, %38 : vector<2x4x256xf32>
    %40 = vector.shape_cast %34 : vector<4x1xf32> to vector<1x4x1xf32>
    %41 = vector.broadcast %40 : vector<1x4x1xf32> to vector<2x4x256xf32>
    %42 = arith.mulf %39, %41 : vector<2x4x256xf32>
    %43 = arith.addf %33, %42 : vector<2x4x256xf32>
    %44 = vector.extract_strided_slice %1 {offsets = [0, 4], sizes = [4, 1], strides = [1, 1]} : vector<4x9xf32> to vector<4x1xf32>
    %45 = vector.shape_cast %44 : vector<4x1xf32> to vector<1x4x1xf32>
    %46 = vector.broadcast %45 : vector<1x4x1xf32> to vector<2x4x256xf32>
    %47 = arith.mulf %0, %46 : vector<2x4x256xf32>
    %48 = arith.addf %43, %47 : vector<2x4x256xf32>
    %49 = vector.extract_strided_slice %1 {offsets = [0, 5], sizes = [4, 1], strides = [1, 1]} : vector<4x9xf32> to vector<4x1xf32>
    %c255_i32 = arith.constant 255 : i32
    %50 = tpu.dynamic_rotate %0 by %c255_i32 dim 2 : vector<2x4x256xf32>, i32 -> vector<2x4x256xf32>
    %51 = vector.extract_strided_slice %2 {offsets = [5, 0], sizes = [1, 256], strides = [1, 1]} : vector<9x256xf32> to vector<1x256xf32>
    %52 = vector.shape_cast %51 : vector<1x256xf32> to vector<1x1x256xf32>
    %53 = vector.broadcast %52 : vector<1x1x256xf32> to vector<2x4x256xf32>
    %54 = arith.mulf %50, %53 : vector<2x4x256xf32>
    %55 = vector.shape_cast %49 : vector<4x1xf32> to vector<1x4x1xf32>
    %56 = vector.broadcast %55 : vector<1x4x1xf32> to vector<2x4x256xf32>
    %57 = arith.mulf %54, %56 : vector<2x4x256xf32>
    %58 = arith.addf %48, %57 : vector<2x4x256xf32>
    %59 = vector.extract_strided_slice %1 {offsets = [0, 6], sizes = [4, 1], strides = [1, 1]} : vector<4x9xf32> to vector<4x1xf32>
    %c241_i32 = arith.constant 241 : i32
    %60 = tpu.dynamic_rotate %0 by %c241_i32 dim 2 : vector<2x4x256xf32>, i32 -> vector<2x4x256xf32>
    %61 = vector.extract_strided_slice %2 {offsets = [6, 0], sizes = [1, 256], strides = [1, 1]} : vector<9x256xf32> to vector<1x256xf32>
    %62 = vector.shape_cast %61 : vector<1x256xf32> to vector<1x1x256xf32>
    %63 = vector.broadcast %62 : vector<1x1x256xf32> to vector<2x4x256xf32>
    %64 = arith.mulf %60, %63 : vector<2x4x256xf32>
    %65 = vector.shape_cast %59 : vector<4x1xf32> to vector<1x4x1xf32>
    %66 = vector.broadcast %65 : vector<1x4x1xf32> to vector<2x4x256xf32>
    %67 = arith.mulf %64, %66 : vector<2x4x256xf32>
    %68 = arith.addf %58, %67 : vector<2x4x256xf32>
    %69 = vector.extract_strided_slice %1 {offsets = [0, 7], sizes = [4, 1], strides = [1, 1]} : vector<4x9xf32> to vector<4x1xf32>
    %c240_i32 = arith.constant 240 : i32
    %70 = tpu.dynamic_rotate %0 by %c240_i32 dim 2 : vector<2x4x256xf32>, i32 -> vector<2x4x256xf32>
    %71 = vector.extract_strided_slice %2 {offsets = [7, 0], sizes = [1, 256], strides = [1, 1]} : vector<9x256xf32> to vector<1x256xf32>
    %72 = vector.shape_cast %71 : vector<1x256xf32> to vector<1x1x256xf32>
    %73 = vector.broadcast %72 : vector<1x1x256xf32> to vector<2x4x256xf32>
    %74 = arith.mulf %70, %73 : vector<2x4x256xf32>
    %75 = vector.shape_cast %69 : vector<4x1xf32> to vector<1x4x1xf32>
    %76 = vector.broadcast %75 : vector<1x4x1xf32> to vector<2x4x256xf32>
    %77 = arith.mulf %74, %76 : vector<2x4x256xf32>
    %78 = arith.addf %68, %77 : vector<2x4x256xf32>
    %79 = vector.extract_strided_slice %1 {offsets = [0, 8], sizes = [4, 1], strides = [1, 1]} : vector<4x9xf32> to vector<4x1xf32>
    %c239_i32 = arith.constant 239 : i32
    %80 = tpu.dynamic_rotate %0 by %c239_i32 dim 2 : vector<2x4x256xf32>, i32 -> vector<2x4x256xf32>
    %81 = vector.extract_strided_slice %2 {offsets = [8, 0], sizes = [1, 256], strides = [1, 1]} : vector<9x256xf32> to vector<1x256xf32>
    %82 = vector.shape_cast %81 : vector<1x256xf32> to vector<1x1x256xf32>
    %83 = vector.broadcast %82 : vector<1x1x256xf32> to vector<2x4x256xf32>
    %84 = arith.mulf %80, %83 : vector<2x4x256xf32>
    %85 = vector.shape_cast %79 : vector<4x1xf32> to vector<1x4x1xf32>
    %86 = vector.broadcast %85 : vector<1x4x1xf32> to vector<2x4x256xf32>
    %87 = arith.mulf %84, %86 : vector<2x4x256xf32>
    %88 = arith.addf %78, %87 : vector<2x4x256xf32>
    %c0_6 = arith.constant 0 : index
    %c0_7 = arith.constant 0 : index
    %89 = vector.load %arg3[%c0_6, %c0_7] : memref<4x1xf32, #tpu.memory_space<vmem>>, vector<4x1xf32>
    %90 = vector.shape_cast %89 : vector<4x1xf32> to vector<1x4x1xf32>
    %91 = vector.broadcast %90 : vector<1x4x1xf32> to vector<2x4x256xf32>
    %92 = arith.addf %88, %91 : vector<2x4x256xf32>
    %93 = arith.negf %92 : vector<2x4x256xf32>
    %94 = math.exp %93 : vector<2x4x256xf32>
    %cst_8 = arith.constant 1.000000e+00 : f32
    %95 = vector.broadcast %cst_8 : f32 to vector<2x4x256xf32>
    %96 = arith.addf %95, %94 : vector<2x4x256xf32>
    %97 = arith.divf %95, %96 : vector<2x4x256xf32>
    %98 = arith.mulf %92, %97 : vector<2x4x256xf32>
    %cst_9 = arith.constant dense<0.000000e+00> : vector<2x4xf32>
    %99 = vector.multi_reduction <add>, %98, %cst_9 [2] : vector<2x4x256xf32> to vector<2x4xf32>
    %cst_10 = arith.constant 3.906250e-03 : f32
    %100 = vector.broadcast %cst_10 : f32 to vector<2x4xf32>
    %101 = arith.mulf %99, %100 : vector<2x4xf32>
    %102 = arith.truncf %101 : vector<2x4xf32> to vector<2x4xbf16>
    %c0_11 = arith.constant 0 : index
    %c0_12 = arith.constant 0 : index
    %103 = vector.load %arg5[%c0_11, %c0_12] : memref<4x16xbf16, #tpu.memory_space<vmem>>, vector<4x16xbf16>
    %cst_13 = arith.constant dense<0.000000e+00> : vector<2x16xf32>
    %104 = tpu.matmul %102, %103, %cst_13 {dimension_numbers = #tpu.dot_dimension_numbers<[1], [0], [0], [1], [0, 0, 1, 1], [], []>} : vector<2x4xbf16>, vector<4x16xbf16>, vector<2x16xf32> -> vector<2x16xf32>
    %c0_14 = arith.constant 0 : index
    %c0_15 = arith.constant 0 : index
    %105 = vector.load %arg6[%c0_14, %c0_15] : memref<1x16xf32, #tpu.memory_space<vmem>>, vector<1x16xf32>
    %106 = vector.broadcast %105 : vector<1x16xf32> to vector<2x16xf32>
    %107 = arith.addf %104, %106 : vector<2x16xf32>
    %108 = arith.negf %107 : vector<2x16xf32>
    %109 = math.exp %108 : vector<2x16xf32>
    %cst_16 = arith.constant 1.000000e+00 : f32
    %110 = vector.broadcast %cst_16 : f32 to vector<2x16xf32>
    %111 = arith.addf %110, %109 : vector<2x16xf32>
    %112 = arith.divf %110, %111 : vector<2x16xf32>
    %113 = arith.mulf %107, %112 : vector<2x16xf32>
    %114 = arith.truncf %113 : vector<2x16xf32> to vector<2x16xbf16>
    %c0_17 = arith.constant 0 : index
    %c0_18 = arith.constant 0 : index
    %115 = vector.load %arg7[%c0_17, %c0_18] : memref<16x4xbf16, #tpu.memory_space<vmem>>, vector<16x4xbf16>
    %cst_19 = arith.constant dense<0.000000e+00> : vector<2x4xf32>
    %116 = tpu.matmul %114, %115, %cst_19 {dimension_numbers = #tpu.dot_dimension_numbers<[1], [0], [0], [1], [0, 0, 1, 1], [], []>} : vector<2x16xbf16>, vector<16x4xbf16>, vector<2x4xf32> -> vector<2x4xf32>
    %c0_20 = arith.constant 0 : index
    %c0_21 = arith.constant 0 : index
    %117 = vector.load %arg8[%c0_20, %c0_21] : memref<1x4xf32, #tpu.memory_space<vmem>>, vector<1x4xf32>
    %118 = vector.broadcast %117 : vector<1x4xf32> to vector<2x4xf32>
    %119 = arith.addf %116, %118 : vector<2x4xf32>
    %120 = arith.negf %119 : vector<2x4xf32>
    %121 = math.exp %120 : vector<2x4xf32>
    %cst_22 = arith.constant 1.000000e+00 : f32
    %122 = vector.broadcast %cst_22 : f32 to vector<2x4xf32>
    %123 = arith.addf %122, %121 : vector<2x4xf32>
    %124 = arith.divf %122, %123 : vector<2x4xf32>
    %c0_23 = arith.constant 0 : index
    %c0_24 = arith.constant 0 : index
    %125 = vector.load %arg9[%c0_23, %c0_24] : memref<4x4xbf16, #tpu.memory_space<vmem>>, vector<4x4xbf16>
    %126 = vector.extract_strided_slice %124 {offsets = [0, 0], sizes = [1, 4], strides = [1, 1]} : vector<2x4xf32> to vector<1x4xf32>
    %127 = arith.extf %125 : vector<4x4xbf16> to vector<4x4xf32>
    %128 = vector.broadcast %126 : vector<1x4xf32> to vector<4x4xf32>
    %129 = arith.mulf %127, %128 : vector<4x4xf32>
    %130 = arith.truncf %129 : vector<4x4xf32> to vector<4x4xbf16>
    %131 = vector.extract_strided_slice %98 {offsets = [0, 0, 0], sizes = [1, 4, 256], strides = [1, 1, 1]} : vector<2x4x256xf32> to vector<1x4x256xf32>
    %132 = vector.shape_cast %131 : vector<1x4x256xf32> to vector<4x256xf32>
    %133 = arith.truncf %132 : vector<4x256xf32> to vector<4x256xbf16>
    %cst_25 = arith.constant dense<0.000000e+00> : vector<4x256xf32>
    %134 = tpu.matmul %130, %133, %cst_25 {dimension_numbers = #tpu.dot_dimension_numbers<[1], [0], [0], [1], [0, 0, 1, 1], [], []>} : vector<4x4xbf16>, vector<4x256xbf16>, vector<4x256xf32> -> vector<4x256xf32>
    %c0_26 = arith.constant 0 : index
    %c0_27 = arith.constant 0 : index
    %135 = vector.load %arg10[%c0_26, %c0_27] : memref<4x1xf32, #tpu.memory_space<vmem>>, vector<4x1xf32>
    %136 = vector.broadcast %135 : vector<4x1xf32> to vector<4x256xf32>
    %137 = arith.addf %134, %136 : vector<4x256xf32>
    %138 = vector.extract_strided_slice %0 {offsets = [0, 0, 0], sizes = [1, 4, 256], strides = [1, 1, 1]} : vector<2x4x256xf32> to vector<1x4x256xf32>
    %139 = vector.shape_cast %138 : vector<1x4x256xf32> to vector<4x256xf32>
    %140 = arith.addf %137, %139 : vector<4x256xf32>
    %c0_28 = arith.constant 0 : index
    %c0_29 = arith.constant 0 : index
    %c0_30 = arith.constant 0 : index
    %141 = vector.load %arg11[%c0_28, %c0_29, %c0_30] : memref<2x4x256xf32, #tpu.memory_space<vmem>>, vector<1x4x256xf32>
    %142 = vector.shape_cast %141 : vector<1x4x256xf32> to vector<4x256xf32>
    %143 = vector.shape_cast %140 : vector<4x256xf32> to vector<1x4x256xf32>
    tpu.vector_store %arg11[%c0_28, %c0_29, %c0_30], %143 {strides = array<i32>} : memref<2x4x256xf32, #tpu.memory_space<vmem>>, vector<1x4x256xf32>,
    %c0_31 = arith.constant 0 : index
    %c0_32 = arith.constant 0 : index
    %144 = vector.load %arg9[%c0_31, %c0_32] : memref<4x4xbf16, #tpu.memory_space<vmem>>, vector<4x4xbf16>
    %145 = vector.extract_strided_slice %124 {offsets = [1, 0], sizes = [1, 4], strides = [1, 1]} : vector<2x4xf32> to vector<1x4xf32>
    %146 = arith.extf %144 : vector<4x4xbf16> to vector<4x4xf32>
    %147 = vector.broadcast %145 : vector<1x4xf32> to vector<4x4xf32>
    %148 = arith.mulf %146, %147 : vector<4x4xf32>
    %149 = arith.truncf %148 : vector<4x4xf32> to vector<4x4xbf16>
    %150 = vector.extract_strided_slice %98 {offsets = [1, 0, 0], sizes = [1, 4, 256], strides = [1, 1, 1]} : vector<2x4x256xf32> to vector<1x4x256xf32>
    %151 = vector.shape_cast %150 : vector<1x4x256xf32> to vector<4x256xf32>
    %152 = arith.truncf %151 : vector<4x256xf32> to vector<4x256xbf16>
    %cst_33 = arith.constant dense<0.000000e+00> : vector<4x256xf32>
    %153 = tpu.matmul %149, %152, %cst_33 {dimension_numbers = #tpu.dot_dimension_numbers<[1], [0], [0], [1], [0, 0, 1, 1], [], []>} : vector<4x4xbf16>, vector<4x256xbf16>, vector<4x256xf32> -> vector<4x256xf32>
    %c0_34 = arith.constant 0 : index
    %c0_35 = arith.constant 0 : index
    %154 = vector.load %arg10[%c0_34, %c0_35] : memref<4x1xf32, #tpu.memory_space<vmem>>, vector<4x1xf32>
    %155 = vector.broadcast %154 : vector<4x1xf32> to vector<4x256xf32>
    %156 = arith.addf %153, %155 : vector<4x256xf32>
    %157 = vector.extract_strided_slice %0 {offsets = [1, 0, 0], sizes = [1, 4, 256], strides = [1, 1, 1]} : vector<2x4x256xf32> to vector<1x4x256xf32>
    %158 = vector.shape_cast %157 : vector<1x4x256xf32> to vector<4x256xf32>
    %159 = arith.addf %156, %158 : vector<4x256xf32>
    %c1 = arith.constant 1 : index
    %c0_36 = arith.constant 0 : index
    %c0_37 = arith.constant 0 : index
    %160 = vector.load %arg11[%c1, %c0_36, %c0_37] : memref<2x4x256xf32, #tpu.memory_space<vmem>>, vector<1x4x256xf32>
    %161 = vector.shape_cast %160 : vector<1x4x256xf32> to vector<4x256xf32>
    %162 = vector.shape_cast %159 : vector<4x256xf32> to vector<1x4x256xf32>
    tpu.vector_store %arg11[%c1, %c0_36, %c0_37], %162 {strides = array<i32>} : memref<2x4x256xf32, #tpu.memory_space<vmem>>, vector<1x4x256xf32>,
    return
  }
  func.func @transform_0(%arg0: i32) -> (i32, i32, i32) {
    %c0_i32 = arith.constant 0 : i32
    %c0_i32_0 = arith.constant 0 : i32
    %c0_i32_1 = arith.constant 0 : i32
    return %arg0, %c0_i32, %c0_i32_0 : i32, i32, i32
  }
  func.func @transform_1(%arg0: i32) -> (i32, i32) {
    %c0_i32 = arith.constant 0 : i32
    %c0_i32_0 = arith.constant 0 : i32
    %c0_i32_1 = arith.constant 0 : i32
    return %c0_i32, %c0_i32_0 : i32, i32
  }
  func.func @transform_2(%arg0: i32) -> (i32, i32) {
    %c0_i32 = arith.constant 0 : i32
    %c0_i32_0 = arith.constant 0 : i32
    %c0_i32_1 = arith.constant 0 : i32
    return %c0_i32, %c0_i32_0 : i32, i32
  }
  func.func @transform_3(%arg0: i32) -> (i32, i32) {
    %c0_i32 = arith.constant 0 : i32
    %c0_i32_0 = arith.constant 0 : i32
    %c0_i32_1 = arith.constant 0 : i32
    return %c0_i32, %c0_i32_0 : i32, i32
  }
  func.func @transform_4(%arg0: i32) -> (i32, i32) {
    %c0_i32 = arith.constant 0 : i32
    %c0_i32_0 = arith.constant 0 : i32
    %c0_i32_1 = arith.constant 0 : i32
    return %c0_i32, %c0_i32_0 : i32, i32
  }
  func.func @transform_5(%arg0: i32) -> (i32, i32) {
    %c0_i32 = arith.constant 0 : i32
    %c0_i32_0 = arith.constant 0 : i32
    %c0_i32_1 = arith.constant 0 : i32
    return %c0_i32, %c0_i32_0 : i32, i32
  }
  func.func @transform_6(%arg0: i32) -> (i32, i32) {
    %c0_i32 = arith.constant 0 : i32
    %c0_i32_0 = arith.constant 0 : i32
    %c0_i32_1 = arith.constant 0 : i32
    return %c0_i32, %c0_i32_0 : i32, i32
  }
  func.func @transform_7(%arg0: i32) -> (i32, i32) {
    %c0_i32 = arith.constant 0 : i32
    %c0_i32_0 = arith.constant 0 : i32
    %c0_i32_1 = arith.constant 0 : i32
    return %c0_i32, %c0_i32_0 : i32, i32
  }
  func.func @transform_8(%arg0: i32) -> (i32, i32) {
    %c0_i32 = arith.constant 0 : i32
    %c0_i32_0 = arith.constant 0 : i32
    %c0_i32_1 = arith.constant 0 : i32
    return %c0_i32, %c0_i32_0 : i32, i32
  }
  func.func @transform_9(%arg0: i32) -> (i32, i32) {
    %c0_i32 = arith.constant 0 : i32
    %c0_i32_0 = arith.constant 0 : i32
    %c0_i32_1 = arith.constant 0 : i32
    return %c0_i32, %c0_i32_0 : i32, i32
  }
  func.func @transform_10(%arg0: i32) -> (i32, i32, i32) {
    %c0_i32 = arith.constant 0 : i32
    %c0_i32_0 = arith.constant 0 : i32
    %c0_i32_1 = arith.constant 0 : i32
    return %arg0, %c0_i32, %c0_i32_0 : i32, i32, i32
  }
}

</mosaic_0001>

<llo_original>
// kernel: tpu_custom_call.1
$region0: #{tpu_custom_call.1}
  #allocation0 [shape = 'u32[]', space=smem, size = 0x4, offset = 0x4, fixed_abs, tag = 'smem constant byte address 0x4 - core index']
  #allocation1 [shape = 'u32[144,128]{1,0:T(1,128)}', space=vmem, size = 0x12000, scoped, tag = 'internal scratch']
  %s0 = inlined_call_operand.vmem [shape: f32[2,4,256], index: 0, kind: input, shape index: {}]
  %s1 = inlined_call_operand.vmem [shape: f32[4,9], index: 1, kind: input, shape index: {}]
  %s2 = inlined_call_operand.vmem [shape: f32[4,1], index: 2, kind: input, shape index: {}]
  %s3 = inlined_call_operand.hbm [shape: f32[9,256], index: 3, kind: input, shape index: {}]
  %s4 = inlined_call_operand.vmem [shape: bf16[4,16], index: 4, kind: input, shape index: {}]
  %s5 = inlined_call_operand.vmem [shape: f32[1,16], index: 5, kind: input, shape index: {}]
  %s6 = inlined_call_operand.vmem [shape: bf16[16,4], index: 6, kind: input, shape index: {}]
  %s7 = inlined_call_operand.vmem [shape: f32[1,4], index: 7, kind: input, shape index: {}]
  %s8 = inlined_call_operand.vmem [shape: bf16[4,4], index: 8, kind: input, shape index: {}]
  %s9 = inlined_call_operand.vmem [shape: f32[4,1], index: 9, kind: input, shape index: {}]
  %s10 = inlined_call_operand.hbm [shape: f32[2,4,256], index: 10, kind: output, shape index: {}]
  %s11 = sld [smem:[#allocation0]]
  $region54: #{tpu_custom_call.1} parent=0
    _
  %s13 = ssub.s32 1, %s11
  %s14 = scalar_select 0, %s13, %s11
  $region1: #{tpu_custom_call.1} parent=0
    #allocation2 [shape = 'u8[16384]{0}', space=vmem, size = 0x4000, scoped, tag = 'input window, operand 3, single buffered']
    #allocation3 [shape = 's32[1]{0}', space=sflag, size = 0x4, scoped, tag = 'scoped memory for tpu_custom_call.1']
    #allocation4 [shape = 's32[1]{0}', space=sflag, size = 0x4, scoped, tag = 'scoped memory for tpu_custom_call.1']
    #allocation5 [shape = 'u8[8192]{0}', space=vmem, size = 0x2000, scoped, tag = 'output window, operand 0, single buffered']
    %15 = vsyncpa [#allocation3], 0
    %16 = vsyncpa [#allocation4], 0
    // Predicated region
    $region2: #{tpu_custom_call.1} parent=1 // pred_check
      _
    $region3: #{tpu_custom_call.1} parent=1 // pred_check_branch
      %18 = sbr.rel (0) target = $region5
    $region4: #{tpu_custom_call.1} parent=1 // pred_region
      _
    $region5: #{tpu_custom_call.1} parent=1 // pred_fallthru
      _
    // Predicated region
    $region6: #{tpu_custom_call.1} parent=1 // pred_check
      _
    $region7: #{tpu_custom_call.1} parent=1 // pred_check_branch
      %20 = sbr.rel (0) target = $region9
    $region8: #{tpu_custom_call.1} parent=1 // pred_region
      _
    $region9: #{tpu_custom_call.1} parent=1 // pred_fallthru
      _
    // Predicated region
    $region10: #{tpu_custom_call.1} parent=1 // pred_check
      _
    $region11: #{tpu_custom_call.1} parent=1 // pred_check_branch
      %22 = sbr.rel (0) target = $region13
    $region12: #{tpu_custom_call.1} parent=1 // pred_region
      _
    $region13: #{tpu_custom_call.1} parent=1 // pred_fallthru
      _
    // Predicated region
    $region14: #{tpu_custom_call.1} parent=1 // pred_check
      _
    $region15: #{tpu_custom_call.1} parent=1 // pred_check_branch
      %24 = sbr.rel (0) target = $region17
    $region16: #{tpu_custom_call.1} parent=1 // pred_region
      %s26 = ssub.s32 512, 512
      %27 = vsyncadd [#allocation3], %s26
      %s28 = sshll.u32 [#allocation2], 4
      %s29 = int_to_ptr.vmem [resolvable:$true] %s28
      %34 = dma.hbm_to_vmem [thread:$0]  %s3, 512, %s29, [#allocation3], 256, 256, 16
    $region17: #{tpu_custom_call.1} parent=1 // pred_fallthru
      _
    // Predicated region
    $region18: #{tpu_custom_call.1} parent=1 // pred_check
      _
    $region19: #{tpu_custom_call.1} parent=1 // pred_check_branch
      %36 = sbr.rel (0) target = $region21
    $region20: #{tpu_custom_call.1} parent=1 // pred_region
      _
    $region21: #{tpu_custom_call.1} parent=1 // pred_fallthru
      _
    // Predicated region
    $region22: #{tpu_custom_call.1} parent=1 // pred_check
      _
    $region23: #{tpu_custom_call.1} parent=1 // pred_check_branch
      %38 = sbr.rel (0) target = $region25
    $region24: #{tpu_custom_call.1} parent=1 // pred_region
      _
    $region25: #{tpu_custom_call.1} parent=1 // pred_fallthru
      _
    // Predicated region
    $region26: #{tpu_custom_call.1} parent=1 // pred_check
      _
    $region27: #{tpu_custom_call.1} parent=1 // pred_check_branch
      %40 = sbr.rel (0) target = $region29
    $region28: #{tpu_custom_call.1} parent=1 // pred_region
      _
    $region29: #{tpu_custom_call.1} parent=1 // pred_fallthru
      _
    // Predicated region
    $region30: #{tpu_custom_call.1} parent=1 // pred_check
      _
    $region31: #{tpu_custom_call.1} parent=1 // pred_check_branch
      %42 = sbr.rel (0) target = $region33
    $region32: #{tpu_custom_call.1} parent=1 // pred_region
      _
    $region33: #{tpu_custom_call.1} parent=1 // pred_fallthru
      _
    // Predicated region
    $region34: #{tpu_custom_call.1} parent=1 // pred_check
      _
    $region35: #{tpu_custom_call.1} parent=1 // pred_check_branch
      %44 = sbr.rel (0) target = $region37
    $region36: #{tpu_custom_call.1} parent=1 // pred_region
      _
    $region37: #{tpu_custom_call.1} parent=1 // pred_fallthru
      _
    // Predicated region
    $region38: #{tpu_custom_call.1} parent=1 // pred_check
      _
    $region39: #{tpu_custom_call.1} parent=1 // pred_check_branch
      %46 = sbr.rel (0) target = $region41
    $region40: #{tpu_custom_call.1} parent=1 // pred_region
      _
    $region41: #{tpu_custom_call.1} parent=1 // pred_fallthru
      _
    // Predicated region
    $region42: #{tpu_custom_call.1} parent=1 // pred_check
      _
    $region43: #{tpu_custom_call.1} parent=1 // pred_check_branch
      %48 = sbr.rel (0) target = $region45
    $region44: #{tpu_custom_call.1} parent=1 // pred_region
      %49 = dma.done [#allocation3], 512
    $region45: #{tpu_custom_call.1} parent=1 // pred_fallthru
      _
    %v51 = vld [vmem:[%s0] sm:$0xff]
    %v52 = vld [vmem:[%s0 + $0x8] sm:$0xff]
    %v53 = vld [vmem:[%s1] sm:$0xf]
    %v54 = vld [vmem:[#allocation2] sm:$0xff]
    %v55 = vld [vmem:[#allocation2 + $0x8] sm:$0xff]
    %v56 = vld [vmem:[#allocation2 + $0x10] sm:$0x1]
    %v57 = vld [vmem:[#allocation2 + $0x18] sm:$0x1]
    %v60 = vcombine.high %v51, %v51
    %v61 = vcombine.high %v52, %v52
    %64 = vrot.lane.b32.xlu0 %v51, 17
    %v65 = vpop.permute.xlu0 %64
    %66 = vrot.lane.b32.xlu0 %v52, 17
    %v67 = vpop.permute.xlu0 %66
    %68 = vrot.lane.b32.xlu0 %v60, 17
    %v69 = vpop.permute.xlu0 %68
    %70 = vrot.lane.b32.xlu0 %v61, 17
    %v71 = vpop.permute.xlu0 %70
    %v72 = vlaneseq
    %v73 = vand.u32 %v72, 127
    %vm74 = vcmp.lt.s32.totalorder %v73, 17
    %v75 = vsel %vm74, %v65, %v69
    %v76 = vsel %vm74, %v67, %v71
    %v77 = vsel %vm74, %v69, %v65
    %v78 = vsel %vm74, %v71, %v67
    %v79 = vlaneseq
    %v80 = vshrl.u32 %v79, 7
    %v81 = vsub.s32 0, %v80
    %v82 = vrot.slane %v54, %v81
    %v83 = vlaneseq
    %v84 = vshrl.u32 %v83, 7
    %v85 = vsub.s32 0, %v84
    %v86 = vrot.slane %v55, %v85
    %v87 = vmul.f32 %v77, %v82
    %v88 = vmul.f32 %v75, %v86
    %v89 = vmul.f32 %v78, %v82
    %v90 = vmul.f32 %v76, %v86
    %92 = vset.pattern.permute.xlu0 0
    %93 = vperm.xlu0 %92, %v53
    %v94 = vpop.permute.xlu0 %93
    %v96 = vmul.f32 %v87, %v94
    %v97 = vmul.f32 %v88, %v94
    %v98 = vmul.f32 %v89, %v94
    %v99 = vmul.f32 %v90, %v94
    %v100 = vadd.f32 %v96, 0.0
    %v101 = vadd.f32 %v97, 0.0
    %v102 = vadd.f32 %v98, 0.0
    %v103 = vadd.f32 %v99, 0.0
    %104 = vrot.lane.b32.xlu0 %v51, 16
    %v105 = vpop.permute.xlu0 %104
    %106 = vrot.lane.b32.xlu0 %v52, 16
    %v107 = vpop.permute.xlu0 %106
    %108 = vrot.lane.b32.xlu0 %v60, 16
    %v109 = vpop.permute.xlu0 %108
    %110 = vrot.lane.b32.xlu0 %v61, 16
    %v111 = vpop.permute.xlu0 %110
    %vm112 = vcmp.lt.s32.totalorder %v73, 16
    %v113 = vsel %vm112, %v105, %v109
    %v114 = vsel %vm112, %v107, %v111
    %v115 = vsel %vm112, %v109, %v105
    %v116 = vsel %vm112, %v111, %v107
    %v117 = vlaneseq
    %v118 = vshrl.u32 %v117, 7
    %v119 = vsub.s32 1, %v118
    %v120 = vrot.slane %v54, %v119
    %v121 = vlaneseq
    %v122 = vshrl.u32 %v121, 7
    %v123 = vsub.s32 1, %v122
    %v124 = vrot.slane %v55, %v123
    %v125 = vmul.f32 %v115, %v120
    %v126 = vmul.f32 %v113, %v124
    %v127 = vmul.f32 %v116, %v120
    %v128 = vmul.f32 %v114, %v124
    %129 = vset.pattern.permute.xlu0 1
    %130 = vperm.xlu0 %129, %v53
    %v131 = vpop.permute.xlu0 %130
    %v133 = vmul.f32 %v125, %v131
    %v134 = vmul.f32 %v126, %v131
    %v135 = vmul.f32 %v127, %v131
    %v136 = vmul.f32 %v128, %v131
    %v137 = vadd.f32 %v100, %v133
    %v138 = vadd.f32 %v101, %v134
    %v139 = vadd.f32 %v102, %v135
    %v140 = vadd.f32 %v103, %v136
    %141 = vrot.lane.b32.xlu0 %v51, 15
    %v142 = vpop.permute.xlu0 %141
    %143 = vrot.lane.b32.xlu0 %v52, 15
    %v144 = vpop.permute.xlu0 %143
    %145 = vrot.lane.b32.xlu0 %v60, 15
    %v146 = vpop.permute.xlu0 %145
    %147 = vrot.lane.b32.xlu0 %v61, 15
    %v148 = vpop.permute.xlu0 %147
    %vm149 = vcmp.lt.s32.totalorder %v73, 15
    %v150 = vsel %vm149, %v142, %v146
    %v151 = vsel %vm149, %v144, %v148
    %v152 = vsel %vm149, %v146, %v142
    %v153 = vsel %vm149, %v148, %v144
    %v154 = vlaneseq
    %v155 = vshrl.u32 %v154, 7
    %v156 = vsub.s32 2, %v155
    %v157 = vrot.slane %v54, %v156
    %v158 = vlaneseq
    %v159 = vshrl.u32 %v158, 7
    %v160 = vsub.s32 2, %v159
    %v161 = vrot.slane %v55, %v160
    %v162 = vmul.f32 %v152, %v157
    %v163 = vmul.f32 %v150, %v161
    %v164 = vmul.f32 %v153, %v157
    %v165 = vmul.f32 %v151, %v161
    %166 = vset.pattern.permute.xlu0 2
    %167 = vperm.xlu0 %166, %v53
    %v168 = vpop.permute.xlu0 %167
    %v170 = vmul.f32 %v162, %v168
    %v171 = vmul.f32 %v163, %v168
    %v172 = vmul.f32 %v164, %v168
    %v173 = vmul.f32 %v165, %v168
    %v174 = vadd.f32 %v137, %v170
    %v175 = vadd.f32 %v138, %v171
    %v176 = vadd.f32 %v139, %v172
    %v177 = vadd.f32 %v140, %v173
    %178 = vrot.lane.b32.xlu0 %v51, 1
    %v179 = vpop.permute.xlu0 %178
    %180 = vrot.lane.b32.xlu0 %v52, 1
    %v181 = vpop.permute.xlu0 %180
    %182 = vrot.lane.b32.xlu0 %v60, 1
    %v183 = vpop.permute.xlu0 %182
    %184 = vrot.lane.b32.xlu0 %v61, 1
    %v185 = vpop.permute.xlu0 %184
    %vm186 = vcmp.lt.s32.totalorder %v73, 1
    %v187 = vsel %vm186, %v179, %v183
    %v188 = vsel %vm186, %v181, %v185
    %v189 = vsel %vm186, %v183, %v179
    %v190 = vsel %vm186, %v185, %v181
    %v191 = vlaneseq
    %v192 = vshrl.u32 %v191, 7
    %v193 = vsub.s32 3, %v192
    %v194 = vrot.slane %v54, %v193
    %v195 = vlaneseq
    %v196 = vshrl.u32 %v195, 7
    %v197 = vsub.s32 3, %v196
    %v198 = vrot.slane %v55, %v197
    %v199 = vmul.f32 %v189, %v194
    %v200 = vmul.f32 %v187, %v198
    %v201 = vmul.f32 %v190, %v194
    %v202 = vmul.f32 %v188, %v198
    %203 = vset.pattern.permute.xlu0 3
    %204 = vperm.xlu0 %203, %v53
    %v205 = vpop.permute.xlu0 %204
    %v207 = vmul.f32 %v199, %v205
    %v208 = vmul.f32 %v200, %v205
    %v209 = vmul.f32 %v201, %v205
    %v210 = vmul.f32 %v202, %v205
    %v211 = vadd.f32 %v174, %v207
    %v212 = vadd.f32 %v175, %v208
    %v213 = vadd.f32 %v176, %v209
    %v214 = vadd.f32 %v177, %v210
    %215 = vset.pattern.permute.xlu0 4
    %216 = vperm.xlu0 %215, %v53
    %v217 = vpop.permute.xlu0 %216
    %v219 = vunpack.c.l.s4 839922192
    %v220 = vunpack.c.0.s8 %v219
    %v221 = vlaneseq
    %v222 = vshrl.u32 %v221, 7
    %v223 = vsub.s32 %v220, %v222
    %v224 = vrot.slane %v217, %v223
    %v226 = vmul.f32 %v51, %v224
    %v227 = vmul.f32 %v52, %v224
    %v230 = vcombine.high %v226, %v226
    %v231 = vcombine.high %v227, %v227
    %v234 = vadd.f32 %v211, %v226
    %v235 = vadd.f32 %v212, %v230
    %v236 = vadd.f32 %v213, %v227
    %v237 = vadd.f32 %v214, %v231
    %238 = vrot.lane.b32.xlu0 %v51, 127
    %v239 = vpop.permute.xlu0 %238
    %240 = vrot.lane.b32.xlu0 %v52, 127
    %v241 = vpop.permute.xlu0 %240
    %242 = vrot.lane.b32.xlu0 %v60, 127
    %v243 = vpop.permute.xlu0 %242
    %244 = vrot.lane.b32.xlu0 %v61, 127
    %v245 = vpop.permute.xlu0 %244
    %vm246 = vcmp.lt.s32.totalorder %v73, 127
    %v247 = vsel %vm246, %v239, %v243
    %v248 = vsel %vm246, %v241, %v245
    %v249 = vsel %vm246, %v243, %v239
    %v250 = vsel %vm246, %v245, %v241
    %v251 = vlaneseq
    %v252 = vshrl.u32 %v251, 7
    %v253 = vsub.s32 5, %v252
    %v254 = vrot.slane %v54, %v253
    %v255 = vlaneseq
    %v256 = vshrl.u32 %v255, 7
    %v257 = vsub.s32 5, %v256
    %v258 = vrot.slane %v55, %v257
    %v259 = vmul.f32 %v247, %v254
    %v260 = vmul.f32 %v249, %v258
    %v261 = vmul.f32 %v248, %v254
    %v262 = vmul.f32 %v250, %v258
    %263 = vset.pattern.permute.xlu0 5
    %264 = vperm.xlu0 %263, %v53
    %v265 = vpop.permute.xlu0 %264
    %v267 = vmul.f32 %v259, %v265
    %v268 = vmul.f32 %v260, %v265
    %v269 = vmul.f32 %v261, %v265
    %v270 = vmul.f32 %v262, %v265
    %v271 = vadd.f32 %v234, %v267
    %v272 = vadd.f32 %v235, %v268
    %v273 = vadd.f32 %v236, %v269
    %v274 = vadd.f32 %v237, %v270
    %275 = vrot.lane.b32.xlu0 %v51, 113
    %v276 = vpop.permute.xlu0 %275
    %277 = vrot.lane.b32.xlu0 %v52, 113
    %v278 = vpop.permute.xlu0 %277
    %279 = vrot.lane.b32.xlu0 %v60, 113
    %v280 = vpop.permute.xlu0 %279
    %281 = vrot.lane.b32.xlu0 %v61, 113
    %v282 = vpop.permute.xlu0 %281
    %vm283 = vcmp.lt.s32.totalorder %v73, 113
    %v284 = vsel %vm283, %v276, %v280
    %v285 = vsel %vm283, %v278, %v282
    %v286 = vsel %vm283, %v280, %v276
    %v287 = vsel %vm283, %v282, %v278
    %v288 = vlaneseq
    %v289 = vshrl.u32 %v288, 7
    %v290 = vsub.s32 6, %v289
    %v291 = vrot.slane %v54, %v290
    %v292 = vlaneseq
    %v293 = vshrl.u32 %v292, 7
    %v294 = vsub.s32 6, %v293
    %v295 = vrot.slane %v55, %v294
    %v296 = vmul.f32 %v284, %v291
    %v297 = vmul.f32 %v286, %v295
    %v298 = vmul.f32 %v285, %v291
    %v299 = vmul.f32 %v287, %v295
    %300 = vset.pattern.permute.xlu0 6
    %301 = vperm.xlu0 %300, %v53
    %v302 = vpop.permute.xlu0 %301
    %v304 = vmul.f32 %v296, %v302
    %v305 = vmul.f32 %v297, %v302
    %v306 = vmul.f32 %v298, %v302
    %v307 = vmul.f32 %v299, %v302
    %v308 = vadd.f32 %v271, %v304
    %v309 = vadd.f32 %v272, %v305
    %v310 = vadd.f32 %v273, %v306
    %v311 = vadd.f32 %v274, %v307
    %312 = vrot.lane.b32.xlu0 %v51, 112
    %v313 = vpop.permute.xlu0 %312
    %314 = vrot.lane.b32.xlu0 %v52, 112
    %v315 = vpop.permute.xlu0 %314
    %316 = vrot.lane.b32.xlu0 %v60, 112
    %v317 = vpop.permute.xlu0 %316
    %318 = vrot.lane.b32.xlu0 %v61, 112
    %v319 = vpop.permute.xlu0 %318
    %vm320 = vcmp.lt.s32.totalorder %v73, 112
    %v321 = vsel %vm320, %v313, %v317
    %v322 = vsel %vm320, %v315, %v319
    %v323 = vsel %vm320, %v317, %v313
    %v324 = vsel %vm320, %v319, %v315
    %v325 = vlaneseq
    %v326 = vshrl.u32 %v325, 7
    %v327 = vsub.s32 7, %v326
    %v328 = vrot.slane %v54, %v327
    %v329 = vlaneseq
    %v330 = vshrl.u32 %v329, 7
    %v331 = vsub.s32 7, %v330
    %v332 = vrot.slane %v55, %v331
    %v333 = vmul.f32 %v321, %v328
    %v334 = vmul.f32 %v323, %v332
    %v335 = vmul.f32 %v322, %v328
    %v336 = vmul.f32 %v324, %v332
    %337 = vset.pattern.permute.xlu0 7
    %338 = vperm.xlu0 %337, %v53
    %v339 = vpop.permute.xlu0 %338
    %v341 = vmul.f32 %v333, %v339
    %v342 = vmul.f32 %v334, %v339
    %v343 = vmul.f32 %v335, %v339
    %v344 = vmul.f32 %v336, %v339
    %v345 = vadd.f32 %v308, %v341
    %v346 = vadd.f32 %v309, %v342
    %v347 = vadd.f32 %v310, %v343
    %v348 = vadd.f32 %v311, %v344
    %349 = vrot.lane.b32.xlu0 %v51, 111
    %v350 = vpop.permute.xlu0 %349
    %351 = vrot.lane.b32.xlu0 %v52, 111
    %v352 = vpop.permute.xlu0 %351
    %353 = vrot.lane.b32.xlu0 %v60, 111
    %v354 = vpop.permute.xlu0 %353
    %355 = vrot.lane.b32.xlu0 %v61, 111
    %v356 = vpop.permute.xlu0 %355
    %vm357 = vcmp.lt.s32.totalorder %v73, 111
    %v358 = vsel %vm357, %v350, %v354
    %v359 = vsel %vm357, %v352, %v356
    %v360 = vsel %vm357, %v354, %v350
    %v361 = vsel %vm357, %v356, %v352
    %v362 = vlaneseq
    %v363 = vshrl.u32 %v362, 7
    %v364 = vsub.s32 0, %v363
    %v365 = vrot.slane %v56, %v364
    %v366 = vlaneseq
    %v367 = vshrl.u32 %v366, 7
    %v368 = vsub.s32 0, %v367
    %v369 = vrot.slane %v57, %v368
    %v370 = vmul.f32 %v358, %v365
    %v371 = vmul.f32 %v360, %v369
    %v372 = vmul.f32 %v359, %v365
    %v373 = vmul.f32 %v361, %v369
    %374 = vset.pattern.permute.xlu0 8
    %375 = vperm.xlu0 %374, %v53
    %v376 = vpop.permute.xlu0 %375
    %v378 = vmul.f32 %v370, %v376
    %v379 = vmul.f32 %v371, %v376
    %v380 = vmul.f32 %v372, %v376
    %v381 = vmul.f32 %v373, %v376
    %v382 = vadd.f32 %v345, %v378
    %v383 = vadd.f32 %v346, %v379
    %v384 = vadd.f32 %v347, %v380
    %v385 = vadd.f32 %v348, %v381
    %v386 = vld [vmem:[%s2] sm:$0xf]
    %388 = vset.pattern.permute.xlu0 0
    %389 = vperm.xlu0 %388, %v386
    %v390 = vpop.permute.xlu0 %389
    %v392 = vadd.f32 %v382, %v390
    %v393 = vadd.f32 %v383, %v390
    %v394 = vadd.f32 %v384, %v390
    %v395 = vadd.f32 %v385, %v390
    %v396 = vxor.u32 %v392, 2147483648
    %v397 = vxor.u32 %v393, 2147483648
    %v398 = vxor.u32 %v394, 2147483648
    %v399 = vxor.u32 %v395, 2147483648
    %v400 = vmul.f32 %v396, 1.442695
    %v401 = vpow.pop %v400
    %v402 = vmul.f32 %v397, 1.442695
    %v403 = vpow.pop %v402
    %v404 = vmul.f32 %v398, 1.442695
    %v405 = vpow.pop %v404
    %v406 = vmul.f32 %v399, 1.442695
    %v407 = vpow.pop %v406
    %v408 = vadd.f32 %v401, 1.0
    %v409 = vadd.f32 %v403, 1.0
    %v410 = vadd.f32 %v405, 1.0
    %v411 = vadd.f32 %v407, 1.0
    %v412 = vrcp.pop %v408
    %v413 = vmul.f32 1.0, %v412
    %v414 = vrcp.pop %v409
    %v415 = vmul.f32 1.0, %v414
    %v416 = vrcp.pop %v410
    %v417 = vmul.f32 1.0, %v416
    %v418 = vrcp.pop %v411
    %v419 = vmul.f32 1.0, %v418
    %v420 = vmul.f32 %v392, %v413
    %v421 = vmul.f32 %v393, %v415
    %v422 = vmul.f32 %v394, %v417
    %v423 = vmul.f32 %v395, %v419
    %vm424 = vcmask 1043456
    %v425 = vsel %vm424, %v420, 0.0
    %v426 = vsel %vm424, %v421, 0.0
    %v427 = vadd.f32 %v425, %v426
    %428 = vadd.xlane.f32.xlu0 %v427
    %v429 = vpop.xlane.xlu0 %428
    %v430 = vsel %vm424, %v422, 0.0
    %v431 = vsel %vm424, %v423, 0.0
    %v432 = vadd.f32 %v430, %v431
    %433 = vadd.xlane.f32.xlu0 %v432
    %v434 = vpop.xlane.xlu0 %433
    %v435 = vmul.f32 %v429, 0.00390625
    %v436 = vmul.f32 %v434, 0.00390625
    %v437 = vpack.c.bf16 %v435, %v435
    %v438 = vpack.c.bf16 %v436, %v436
    %v439 = vld [vmem:[%s4] sm:$0x3]
    %v440 = vld [vmem:[%s5] sm:$0x1]
    %v442 = vlaneseq
    %v443 = vshrl.u32 %v442, 7
    %v444 = vsub.s32 0, %v443
    %v445 = vrot.slane %v440, %v444
    %v449 = vunpack.c.l.b16 %v437
    %v450 = vunpack.c.l.b16 %v438
    %v451 = vlaneseq
    %v452 = vshrl.u32 %v451, 7
    %v453 = vsub.s32 %v73, %v452
    %v454 = vrot.slane %v449, %v453
    %v455 = vlaneseq
    %v456 = vshrl.u32 %v455, 7
    %v457 = vsub.s32 %v73, %v456
    %v458 = vrot.slane %v450, %v457
    %vm459 = vcmask 1041409
    %v460 = vsel %vm459, %v458, %v454
    %v461 = vpack.c.b16 %v460, %v460
    %vm462 = vcmask 31744
    %v464 = vsel %vm462, %v461, 0
    %vm466 = vcmask 1041408
    %v468 = vsel %vm466, %v439, 0
    %470 = vmatprep.subr.bf16.mxu0 0
    %471 = vmatpush1.bf16.msra.mxu0 %v468
    %472 = vmatprep.subr.bf16.mxu0 0
    %473 = vmatpush1.bf16.msra.mxu0 0
    %474 = vmatprep.subr.bf16.mxu0 0
    %475 = vmatpush1.bf16.msra.mxu0 0
    %476 = vmatprep.subr.bf16.mxu0 0
    %477 = vmatpush1.bf16.msra.mxu0 0
    %478 = vmatprep.subr.bf16.mxu0 0
    %479 = vmatpush1.bf16.msra.mxu0 0
    %480 = vmatprep.subr.bf16.mxu0 0
    %481 = vmatpush1.bf16.msra.mxu0 0
    %482 = vmatprep.subr.bf16.mxu0 0
    %483 = vmatpush1.bf16.msra.mxu0 0
    %484 = vmatprep.subr.bf16.mxu0 0
    %485 = vmatpush1.bf16.msra.mxu0 0
    %486 = vmatprep.subr.bf16.mxu0 0
    %487 = vmatpush1.bf16.msra.mxu0 0
    %488 = vmatprep.subr.bf16.mxu0 0
    %489 = vmatpush1.bf16.msra.mxu0 0
    %490 = vmatprep.subr.bf16.mxu0 0
    %491 = vmatpush1.bf16.msra.mxu0 0
    %492 = vmatprep.subr.bf16.mxu0 0
    %493 = vmatpush1.bf16.msra.mxu0 0
    %494 = vmatprep.subr.bf16.mxu0 0
    %495 = vmatpush1.bf16.msra.mxu0 0
    %496 = vmatprep.subr.bf16.mxu0 0
    %497 = vmatpush1.bf16.msra.mxu0 0
    %498 = vmatprep.subr.bf16.mxu0 0
    %499 = vmatpush1.bf16.msra.mxu0 0
    %500 = vmatprep.subr.bf16.mxu0 0
    %501 = vmatpush1.bf16.msra.mxu0 0
    %502 = vmatprep.mubr.bf16.mxu0 0
    %503 = vmatmul.mubr.bf16.gmra.mrb[0].mxu0 %v464
    %v504 = vpop.f32.mrb[0].mxu0
    %v505 = vadd.f32 %v445, %v504
    %v506 = vpop.f32.mrb[0].mxu0
    %v507 = vpop.f32.mrb[0].mxu0
    %v508 = vpop.f32.mrb[0].mxu0
    %509 = vdwg.mxu0
    %v510 = vxor.u32 %v505, 2147483648
    %v511 = vmul.f32 %v510, 1.442695
    %v512 = vpow.pop %v511
    %v513 = vadd.f32 %v512, 1.0
    %v514 = vrcp.pop %v513
    %v515 = vmul.f32 1.0, %v514
    %v516 = vmul.f32 %v505, %v515
    %v517 = vpack.c.bf16 %v516, %v516
    %v518 = vld [vmem:[%s6] sm:$0xf]
    %v519 = vld [vmem:[%s6 + $0x4] sm:$0xf]
    %v520 = vld [vmem:[%s7] sm:$0x1]
    %v522 = vlaneseq
    %v523 = vshrl.u32 %v522, 7
    %v524 = vsub.s32 0, %v523
    %v525 = vrot.slane %v520, %v524
    %v529 = vunpack.c.l.b16 %v518
    %v530 = vunpack.c.l.b16 %v519
    %v531 = vpack.c.b16 %v530, %v529
    %vm533 = vcmask 130048
    %v535 = vsel %vm533, %v517, 0
    %537 = vmatprep.subr.bf16.mxu0 0
    %538 = vmatpush1.bf16.msra.mxu0 %v531
    %539 = vmatprep.subr.bf16.mxu0 0
    %540 = vmatpush1.bf16.msra.mxu0 0
    %541 = vmatprep.subr.bf16.mxu0 0
    %542 = vmatpush1.bf16.msra.mxu0 0
    %543 = vmatprep.subr.bf16.mxu0 0
    %544 = vmatpush1.bf16.msra.mxu0 0
    %545 = vmatprep.subr.bf16.mxu0 0
    %546 = vmatpush1.bf16.msra.mxu0 0
    %547 = vmatprep.subr.bf16.mxu0 0
    %548 = vmatpush1.bf16.msra.mxu0 0
    %549 = vmatprep.subr.bf16.mxu0 0
    %550 = vmatpush1.bf16.msra.mxu0 0
    %551 = vmatprep.subr.bf16.mxu0 0
    %552 = vmatpush1.bf16.msra.mxu0 0
    %553 = vmatprep.subr.bf16.mxu0 0
    %554 = vmatpush1.bf16.msra.mxu0 0
    %555 = vmatprep.subr.bf16.mxu0 0
    %556 = vmatpush1.bf16.msra.mxu0 0
    %557 = vmatprep.subr.bf16.mxu0 0
    %558 = vmatpush1.bf16.msra.mxu0 0
    %559 = vmatprep.subr.bf16.mxu0 0
    %560 = vmatpush1.bf16.msra.mxu0 0
    %561 = vmatprep.subr.bf16.mxu0 0
    %562 = vmatpush1.bf16.msra.mxu0 0
    %563 = vmatprep.subr.bf16.mxu0 0
    %564 = vmatpush1.bf16.msra.mxu0 0
    %565 = vmatprep.subr.bf16.mxu0 0
    %566 = vmatpush1.bf16.msra.mxu0 0
    %567 = vmatprep.subr.bf16.mxu0 0
    %568 = vmatpush1.bf16.msra.mxu0 0
    %569 = vmatprep.mubr.bf16.mxu0 0
    %570 = vmatmul.mubr.bf16.gmra.mrb[0].mxu0 %v535
    %v571 = vpop.f32.mrb[0].mxu0
    %v572 = vadd.f32 %v525, %v571
    %v573 = vpop.f32.mrb[0].mxu0
    %v574 = vpop.f32.mrb[0].mxu0
    %v575 = vpop.f32.mrb[0].mxu0
    %576 = vdwg.mxu0
    %v577 = vxor.u32 %v572, 2147483648
    %v578 = vmul.f32 %v577, 1.442695
    %v579 = vpow.pop %v578
    %v580 = vadd.f32 %v579, 1.0
    %v581 = vrcp.pop %v580
    %v582 = vmul.f32 1.0, %v581
    %v583 = vld [vmem:[%s8] sm:$0x3]
    %v584 = vunpack.c.l.bf16 %v583
    %v585 = vlaneseq
    %v586 = vshrl.u32 %v585, 7
    %v587 = vsub.s32 0, %v586
    %v588 = vrot.slane %v582, %v587
    %v589 = vmul.f32 %v584, %v588
    %v590 = vpack.c.bf16 %v589, %v589
    %v591 = vpack.c.bf16 %v420, %v420
    %v592 = vpack.c.bf16 %v421, %v421
    %v593 = vld [vmem:[%s9] sm:$0xf]
    %595 = vset.pattern.permute.xlu0 0
    %596 = vperm.xlu0 %595, %v593
    %v597 = vpop.permute.xlu0 %596
    %v600 = vsel %vm462, %v590, 0
    %v603 = vsel %vm466, %v591, 0
    %v606 = vsel %vm466, %v592, 0
    %608 = vmatprep.subr.bf16.mxu0 %v606
    %609 = vmatpush1.bf16.msra.mxu0 %v603
    %610 = vmatprep.subr.bf16.mxu0 0
    %611 = vmatpush1.bf16.msra.mxu0 0
    %612 = vmatprep.subr.bf16.mxu0 0
    %613 = vmatpush1.bf16.msra.mxu0 0
    %614 = vmatprep.subr.bf16.mxu0 0
    %615 = vmatpush1.bf16.msra.mxu0 0
    %616 = vmatprep.subr.bf16.mxu0 0
    %617 = vmatpush1.bf16.msra.mxu0 0
    %618 = vmatprep.subr.bf16.mxu0 0
    %619 = vmatpush1.bf16.msra.mxu0 0
    %620 = vmatprep.subr.bf16.mxu0 0
    %621 = vmatpush1.bf16.msra.mxu0 0
    %622 = vmatprep.subr.bf16.mxu0 0
    %623 = vmatpush1.bf16.msra.mxu0 0
    %624 = vmatprep.subr.bf16.mxu0 0
    %625 = vmatpush1.bf16.msra.mxu0 0
    %626 = vmatprep.subr.bf16.mxu0 0
    %627 = vmatpush1.bf16.msra.mxu0 0
    %628 = vmatprep.subr.bf16.mxu0 0
    %629 = vmatpush1.bf16.msra.mxu0 0
    %630 = vmatprep.subr.bf16.mxu0 0
    %631 = vmatpush1.bf16.msra.mxu0 0
    %632 = vmatprep.subr.bf16.mxu0 0
    %633 = vmatpush1.bf16.msra.mxu0 0
    %634 = vmatprep.subr.bf16.mxu0 0
    %635 = vmatpush1.bf16.msra.mxu0 0
    %636 = vmatprep.subr.bf16.mxu0 0
    %637 = vmatpush1.bf16.msra.mxu0 0
    %638 = vmatprep.subr.bf16.mxu0 0
    %639 = vmatpush1.bf16.msra.mxu0 0
    %640 = vmatprep.mubr.bf16.mxu0 0
    %641 = vmatmul.mubr.bf16.gmra.mrb[0].mxu0 %v600
    %v642 = vpop.f32.mrb[0].mxu0
    %v643 = vadd.f32 %v597, %v642
    %v644 = vpop.f32.mrb[0].mxu0
    %v645 = vadd.f32 %v597, %v644
    %v646 = vpop.f32.mrb[0].mxu0
    %v647 = vpop.f32.mrb[0].mxu0
    %648 = vdwg.mxu0
    %v649 = vadd.f32 %v643, %v51
    %v650 = vadd.f32 %v645, %v60
    %v653 = vcombine.low %v649, %v650
    %655 = vst [vmem:[#allocation5] sm:$0xff] %v653
    %v656 = vld [vmem:[%s8] sm:$0x3]
    %v657 = vunpack.c.l.bf16 %v656
    %v658 = vlaneseq
    %v659 = vshrl.u32 %v658, 7
    %v660 = vsub.s32 1, %v659
    %v661 = vrot.slane %v582, %v660
    %v662 = vmul.f32 %v657, %v661
    %v663 = vpack.c.bf16 %v662, %v662
    %v664 = vpack.c.bf16 %v422, %v422
    %v665 = vpack.c.bf16 %v423, %v423
    %v666 = vld [vmem:[%s9] sm:$0xf]
    %668 = vset.pattern.permute.xlu0 0
    %669 = vperm.xlu0 %668, %v666
    %v670 = vpop.permute.xlu0 %669
    %v673 = vsel %vm462, %v663, 0
    %v676 = vsel %vm466, %v664, 0
    %v679 = vsel %vm466, %v665, 0
    %681 = vmatprep.subr.bf16.mxu0 %v679
    %682 = vmatpush1.bf16.msra.mxu0 %v676
    %683 = vmatprep.subr.bf16.mxu0 0
    %684 = vmatpush1.bf16.msra.mxu0 0
    %685 = vmatprep.subr.bf16.mxu0 0
    %686 = vmatpush1.bf16.msra.mxu0 0
    %687 = vmatprep.subr.bf16.mxu0 0
    %688 = vmatpush1.bf16.msra.mxu0 0
    %689 = vmatprep.subr.bf16.mxu0 0
    %690 = vmatpush1.bf16.msra.mxu0 0
    %691 = vmatprep.subr.bf16.mxu0 0
    %692 = vmatpush1.bf16.msra.mxu0 0
    %693 = vmatprep.subr.bf16.mxu0 0
    %694 = vmatpush1.bf16.msra.mxu0 0
    %695 = vmatprep.subr.bf16.mxu0 0
    %696 = vmatpush1.bf16.msra.mxu0 0
    %697 = vmatprep.subr.bf16.mxu0 0
    %698 = vmatpush1.bf16.msra.mxu0 0
    %699 = vmatprep.subr.bf16.mxu0 0
    %700 = vmatpush1.bf16.msra.mxu0 0
    %701 = vmatprep.subr.bf16.mxu0 0
    %702 = vmatpush1.bf16.msra.mxu0 0
    %703 = vmatprep.subr.bf16.mxu0 0
    %704 = vmatpush1.bf16.msra.mxu0 0
    %705 = vmatprep.subr.bf16.mxu0 0
    %706 = vmatpush1.bf16.msra.mxu0 0
    %707 = vmatprep.subr.bf16.mxu0 0
    %708 = vmatpush1.bf16.msra.mxu0 0
    %709 = vmatprep.subr.bf16.mxu0 0
    %710 = vmatpush1.bf16.msra.mxu0 0
    %711 = vmatprep.subr.bf16.mxu0 0
    %712 = vmatpush1.bf16.msra.mxu0 0
    %713 = vmatprep.mubr.bf16.mxu0 0
    %714 = vmatmul.mubr.bf16.gmra.mrb[0].mxu0 %v673
    %v715 = vpop.f32.mrb[0].mxu0
    %v716 = vadd.f32 %v670, %v715
    %v717 = vpop.f32.mrb[0].mxu0
    %v718 = vadd.f32 %v670, %v717
    %v719 = vpop.f32.mrb[0].mxu0
    %v720 = vpop.f32.mrb[0].mxu0
    %721 = vdwg.mxu0
    %v722 = vadd.f32 %v716, %v52
    %v723 = vadd.f32 %v718, %v61
    %v726 = vcombine.low %v722, %v723
    %s728 = scalar_lea.vmem [#allocation5], 8
    %729 = vst [vmem:[%s728] sm:$0xff] %v726
    // Predicated region
    $region46: #{tpu_custom_call.1} parent=1 // pred_check
      _
    $region47: #{tpu_custom_call.1} parent=1 // pred_check_branch
      %731 = sbr.rel (0) target = $region49
    $region48: #{tpu_custom_call.1} parent=1 // pred_region
      %s733 = ssub.s32 256, 256
      %734 = vsyncadd [#allocation4], %s733
      %s735 = sshll.u32 [#allocation5], 4
      %s736 = int_to_ptr.vmem [resolvable:$true] %s735
      %741 = dma.vmem_to_hbm [thread:$0]  %s736, 256, %s10, [#allocation4], 128, 128, 8
    $region49: #{tpu_custom_call.1} parent=1 // pred_fallthru
      _
    // Predicated region
    $region50: #{tpu_custom_call.1} parent=1 // pred_check
      _
    $region51: #{tpu_custom_call.1} parent=1 // pred_check_branch
      %743 = sbr.rel (0) target = $region53
    $region52: #{tpu_custom_call.1} parent=1 // pred_region
      %744 = dma.done [#allocation4], 256
    $region53: #{tpu_custom_call.1} parent=1 // pred_fallthru
      _
    %745 = vsyncpa [#allocation3], 1
    %746 = vsyncpa [#allocation4], 1

</llo_original>
